<compile_context>
chip_gen: v6e
topology: v6e:2x2x1
jax: 0.10.0
libtpu: 0.0.40
codegen_flags: <defaults>
</compile_context>

<pallas_src>
import math

import jax
import jax.numpy as jnp
from jax.experimental import pallas as pl
from jax.experimental.pallas import tpu as pltpu


def _round_down_128(x: int) -> int:
    return (x // 128) * 128


def _per_buffer_budget_bytes() -> int:
    """Byte budget per VMEM tile, chosen per TPU generation at trace time."""
    kind = ""
    try:
        kind = jax.devices()[0].device_kind.lower()
    except Exception:
        pass
    # v6e / v7x: fast HBM makes the ~0.35 us grid-step overhead significant,
    # so use bigger tiles. Anything else (v5e, v4, unknown): stay conservative
    # so double-buffered in+out tiles fit comfortably in scoped VMEM.
    if ("v6" in kind) or ("v7" in kind) or ("tpu7" in kind):
        return 4 << 20
    return 2 << 20


def _pick_tiles(C: int, S: int, itemsize: int, budget_bytes: int):
    """Return (tc, ts, target_elems): tile extents that are either the full dim
    or a multiple of 128, sized to ~budget_bytes per tile."""
    target = max(budget_bytes // itemsize, 128 * 128)  # elements per tile
    side = max(128, _round_down_128(math.isqrt(target)))

    tc = C if C <= side else side
    ts = S if S <= side else side

    # Rebalance: a skinny dim that fits entirely frees budget for the other.
    if tc == C and ts < S:
        room = max(target // max(tc, 1), 128)
        ts = S if S <= room else max(128, _round_down_128(room))
    elif ts == S and tc < C:
        room = max(target // max(ts, 1), 128)
        tc = C if C <= room else max(128, _round_down_128(room))
    return tc, ts, target


def _swap_kernel_2d(x_ref, o_ref):
    # x_ref: (tc, ts) VMEM tile, o_ref: (ts, tc) VMEM tile (batch dim squeezed).
    o_ref[...] = x_ref[...].T


def _swap_kernel_batched(x_ref, o_ref):
    # x_ref: (bb, C, S), o_ref: (bb, S, C).
    # NOTE: .T would reverse ALL three axes -> must use jnp.transpose.
    o_ref[...] = jnp.transpose(x_ref[...], (0, 2, 1))


def swap_layer(x):
    """Equivalent of torch SwapLayer: return x.transpose(1, 2)."""
    B, C, S = x.shape
    itemsize = x.dtype.itemsize
    budget = _per_buffer_budget_bytes()
    tc, ts, target_elems = _pick_tiles(C, S, itemsize, budget)

    bytes_accessed = 2 * x.size * itemsize  # read + write: pure-bandwidth op
    cost = pl.CostEstimate(
        flops=0, transcendentals=0, bytes_accessed=bytes_accessed
    )

    # Batch-block when the whole (C, S) slab fits in one tile: amortize the
    # per-grid-step overhead over several batch elements.
    bb = 1
    if tc == C and ts == S:
        bb = max(1, min(B, target_elems // max(C * S, 1)))

    tile_bytes = bb * tc * ts * itemsize
    # in + out, double-buffered, plus compiler scratch headroom.
    vmem_limit = max(int(4 * tile_bytes + (4 << 20)), 16 << 20)

    if bb > 1:
        grid = (pl.cdiv(B, bb),)
        in_specs = [pl.BlockSpec((bb, C, S), lambda b: (b, 0, 0))]
        out_specs = pl.BlockSpec((bb, S, C), lambda b: (b, 0, 0))
        kernel = _swap_kernel_batched
    else:
        # C-tile axis innermost: consecutive steps write adjacent runs along
        # the output's last (C) dim -> better HBM writeback locality.
        grid = (B, pl.cdiv(S, ts), pl.cdiv(C, tc))
        in_specs = [pl.BlockSpec((None, tc, ts), lambda b, si, ci: (b, ci, si))]
        out_specs = pl.BlockSpec((None, ts, tc), lambda b, si, ci: (b, si, ci))
        kernel = _swap_kernel_2d

    return pl.pallas_call(
        kernel,
        out_shape=jax.ShapeDtypeStruct((B, S, C), x.dtype),
        grid_spec=pl.GridSpec(grid=grid, in_specs=in_specs, out_specs=out_specs),
        compiler_params=pltpu.CompilerParams(
            dimension_semantics=("parallel",) * len(grid),
            vmem_limit_bytes=vmem_limit,
        ),
        cost_estimate=cost,
    )(x)


if __name__ == "__main__":
    key = jax.random.PRNGKey(0)

    # 1) Tiny shape consistent with the module's forward: batch-blocked path.
    B, C, S = 2, 4, 16
    x = jax.random.normal(key, (B, C, S), dtype=jnp.float32)
    y = jax.block_until_ready(swap_layer(x))
    assert y.shape == (B, S, C)
    assert y.dtype == x.dtype
    assert jnp.array_equal(y, jnp.transpose(x, (0, 2, 1)))

    # 2) Mid-size f32 with non-128-multiple dims (batch-blocked).
    x2 = jax.random.normal(jax.random.PRNGKey(0), (2, 200, 640), dtype=jnp.float32)
    y2 = jax.block_until_ready(swap_layer(x2))
    assert jnp.array_equal(y2, jnp.transpose(x2, (0, 2, 1)))

    # 3) Dims larger than one tile on every generation: tiled path with ragged
    #    (masked) edge blocks in both dims.
    x3 = jax.random.normal(jax.random.PRNGKey(0), (1, 1300, 1300), dtype=jnp.float32)
    y3 = jax.block_until_ready(swap_layer(x3))
    assert jnp.array_equal(y3, jnp.transpose(x3, (0, 2, 1)))

    # 4) bf16: exercises the dtype-aware byte budget (tile elems scale 4/itemsize).
    x4 = jax.random.normal(jax.random.PRNGKey(1), (2, 96, 384), dtype=jnp.bfloat16)
    y4 = jax.block_until_ready(swap_layer(x4))
    assert jnp.array_equal(y4, jnp.transpose(x4, (0, 2, 1)))

    print("KERNEL_OK")
</pallas_src>

<mosaic_0001>
module attributes {stable_mosaic.version = 11 : i64} {
  func.func @_swap_kernel_batched(%arg0: i32, %arg1: memref<2x4x16xf32, #tpu.memory_space<vmem>>, %arg2: memref<2x16x4xf32, #tpu.memory_space<vmem>>) attributes {dimension_semantics = [#tpu.dimension_semantics<parallel>], iteration_bounds = array<i64: 1>, scalar_prefetch = 0 : i64, scratch_operands = 0 : i64, tpu.core_type = #tpu.core_type<tc>, window_params = [{transform_indices = @transform_0, window_bounds = array<i64: 2, 4, 16>}, {transform_indices = @transform_1, window_bounds = array<i64: 2, 16, 4>}]} {
    %c0 = arith.constant 0 : index
    %c0_0 = arith.constant 0 : index
    %c0_1 = arith.constant 0 : index
    %0 = vector.load %arg1[%c0, %c0_0, %c0_1] : memref<2x4x16xf32, #tpu.memory_space<vmem>>, vector<2x4x16xf32>
    %1 = tpu.transpose %0, [0, 2, 1] : vector<2x4x16xf32> -> vector<2x16x4xf32>
    %c0_2 = arith.constant 0 : index
    %c0_3 = arith.constant 0 : index
    %c0_4 = arith.constant 0 : index
    %2 = vector.load %arg2[%c0_2, %c0_3, %c0_4] : memref<2x16x4xf32, #tpu.memory_space<vmem>>, vector<2x16x4xf32>
    tpu.vector_store %arg2[%c0_2, %c0_3, %c0_4], %1 {strides = array<i32>} : memref<2x16x4xf32, #tpu.memory_space<vmem>>, vector<2x16x4xf32>,
    return
  }
  func.func @transform_0(%arg0: i32) -> (i32, i32, i32) {
    %c0_i32 = arith.constant 0 : i32
    %c0_i32_0 = arith.constant 0 : i32
    %c0_i32_1 = arith.constant 0 : i32
    return %arg0, %c0_i32, %c0_i32_0 : i32, i32, i32
  }
  func.func @transform_1(%arg0: i32) -> (i32, i32, i32) {
    %c0_i32 = arith.constant 0 : i32
    %c0_i32_0 = arith.constant 0 : i32
    %c0_i32_1 = arith.constant 0 : i32
    return %arg0, %c0_i32, %c0_i32_0 : i32, i32, i32
  }
}

</mosaic_0001>

<llo_original>
// kernel: tpu_custom_call.1
$region0: #{tpu_custom_call.1}
  #allocation0 [shape = 'u32[]', space=smem, size = 0x4, offset = 0x4, fixed_abs, tag = 'smem constant byte address 0x4 - core index']
  #allocation1 [shape = 'u32[144,128]{1,0:T(1,128)}', space=vmem, size = 0x12000, scoped, tag = 'internal scratch']
  %s0 = inlined_call_operand.hbm [shape: f32[2,4,16], index: 0, kind: input, shape index: {}]
  %s1 = inlined_call_operand.vmem [shape: f32[2,16,4], index: 1, kind: output, shape index: {}]
  %s2 = sld [smem:[#allocation0]]
  $region18: #{tpu_custom_call.1} parent=0
    _
  %s4 = ssub.s32 1, %s2
  %s5 = scalar_select 0, %s4, %s2
  $region1: #{tpu_custom_call.1} parent=0
    #allocation2 [shape = 'u8[4096]{0}', space=vmem, size = 0x1000, scoped, tag = 'input window, operand 0, single buffered']
    #allocation3 [shape = 's32[1]{0}', space=sflag, size = 0x4, scoped, tag = 'scoped memory for tpu_custom_call.1']
    %6 = vsyncpa [#allocation3], 0
    // Predicated region
    $region2: #{tpu_custom_call.1} parent=1 // pred_check
      _
    $region3: #{tpu_custom_call.1} parent=1 // pred_check_branch
      %8 = sbr.rel (0) target = $region5
    $region4: #{tpu_custom_call.1} parent=1 // pred_region
      %s10 = ssub.s32 128, 128
      %11 = vsyncadd [#allocation3], %s10
      %s12 = sshll.u32 [#allocation2], 4
      %s13 = int_to_ptr.vmem [resolvable:$true] %s12
      %18 = dma.hbm_to_vmem [thread:$0]  %s0, 128, %s13, [#allocation3], 64, 64, 4
    $region5: #{tpu_custom_call.1} parent=1 // pred_fallthru
      _
    // Predicated region
    $region6: #{tpu_custom_call.1} parent=1 // pred_check
      _
    $region7: #{tpu_custom_call.1} parent=1 // pred_check_branch
      %20 = sbr.rel (0) target = $region9
    $region8: #{tpu_custom_call.1} parent=1 // pred_region
      %21 = dma.done [#allocation3], 128
    $region9: #{tpu_custom_call.1} parent=1 // pred_fallthru
      _
    %v22 = vld [vmem:[#allocation2] sm:$0xf]
    %v23 = vld [vmem:[#allocation2 + $0x4] sm:$0xf]
    %24 = vxpose.xlu0.b32.start [1/16] %v22, 128
    %25 = vxpose.xlu0.b32.cont [2/16] 0.0, 128
    %26 = vxpose.xlu0.b32.cont [3/16] 0.0, 128
    %27 = vxpose.xlu0.b32.cont [4/16] 0.0, 128
    %28 = vxpose.xlu0.b32.cont [5/16] 0.0, 128
    %29 = vxpose.xlu0.b32.cont [6/16] 0.0, 128
    %30 = vxpose.xlu0.b32.cont [7/16] 0.0, 128
    %31 = vxpose.xlu0.b32.cont [8/16] 0.0, 128
    %32 = vxpose.xlu0.b32.cont [9/16] 0.0, 128
    %33 = vxpose.xlu0.b32.cont [10/16] 0.0, 128
    %34 = vxpose.xlu0.b32.cont [11/16] 0.0, 128
    %35 = vxpose.xlu0.b32.cont [12/16] 0.0, 128
    %36 = vxpose.xlu0.b32.cont [13/16] 0.0, 128
    %37 = vxpose.xlu0.b32.cont [14/16] 0.0, 128
    %38 = vxpose.xlu0.b32.cont [15/16] 0.0, 128
    %39 = vxpose.xlu0.b32.end [16/16] 0.0, 128
    %v40 = vpop.trf.xlu0
    %v41 = vpop.trf.xlu0
    %v42 = vpop.trf.xlu0
    %v43 = vpop.trf.xlu0
    %v44 = vpop.trf.xlu0
    %v45 = vpop.trf.xlu0
    %v46 = vpop.trf.xlu0
    %v47 = vpop.trf.xlu0
    %v48 = vpop.trf.xlu0
    %v49 = vpop.trf.xlu0
    %v50 = vpop.trf.xlu0
    %v51 = vpop.trf.xlu0
    %v52 = vpop.trf.xlu0
    %v53 = vpop.trf.xlu0
    %v54 = vpop.trf.xlu0
    %v55 = vpop.trf.xlu0
    %56 = vxpose.xlu0.b32.start [1/16] %v23, 128
    %57 = vxpose.xlu0.b32.cont [2/16] 0.0, 128
    %58 = vxpose.xlu0.b32.cont [3/16] 0.0, 128
    %59 = vxpose.xlu0.b32.cont [4/16] 0.0, 128
    %60 = vxpose.xlu0.b32.cont [5/16] 0.0, 128
    %61 = vxpose.xlu0.b32.cont [6/16] 0.0, 128
    %62 = vxpose.xlu0.b32.cont [7/16] 0.0, 128
    %63 = vxpose.xlu0.b32.cont [8/16] 0.0, 128
    %64 = vxpose.xlu0.b32.cont [9/16] 0.0, 128
    %65 = vxpose.xlu0.b32.cont [10/16] 0.0, 128
    %66 = vxpose.xlu0.b32.cont [11/16] 0.0, 128
    %67 = vxpose.xlu0.b32.cont [12/16] 0.0, 128
    %68 = vxpose.xlu0.b32.cont [13/16] 0.0, 128
    %69 = vxpose.xlu0.b32.cont [14/16] 0.0, 128
    %70 = vxpose.xlu0.b32.cont [15/16] 0.0, 128
    %71 = vxpose.xlu0.b32.end [16/16] 0.0, 128
    %v72 = vpop.trf.xlu0
    %v73 = vpop.trf.xlu0
    %v74 = vpop.trf.xlu0
    %v75 = vpop.trf.xlu0
    %v76 = vpop.trf.xlu0
    %v77 = vpop.trf.xlu0
    %v78 = vpop.trf.xlu0
    %v79 = vpop.trf.xlu0
    %v80 = vpop.trf.xlu0
    %v81 = vpop.trf.xlu0
    %v82 = vpop.trf.xlu0
    %v83 = vpop.trf.xlu0
    %v84 = vpop.trf.xlu0
    %v85 = vpop.trf.xlu0
    %v86 = vpop.trf.xlu0
    %v87 = vpop.trf.xlu0
    %vm88 = vcmask 31744
    %89 = vst.msk [vmem:[%s1] sm:$0xff] %vm88, %v40
    %90 = vst.msk [vmem:[%s1 + $0x8] sm:$0xff] %vm88, %v41
    %91 = vst.msk [vmem:[%s1 + $0x10] sm:$0xff] %vm88, %v72
    %92 = vst.msk [vmem:[%s1 + $0x18] sm:$0xff] %vm88, %v73
    // Predicated region
    $region10: #{tpu_custom_call.1} parent=1 // pred_check
      _
    $region11: #{tpu_custom_call.1} parent=1 // pred_check_branch
      %94 = sbr.rel (0) target = $region13
    $region12: #{tpu_custom_call.1} parent=1 // pred_region
      _
    $region13: #{tpu_custom_call.1} parent=1 // pred_fallthru
      _
    // Predicated region
    $region14: #{tpu_custom_call.1} parent=1 // pred_check
      _
    $region15: #{tpu_custom_call.1} parent=1 // pred_check_branch
      %96 = sbr.rel (0) target = $region17
    $region16: #{tpu_custom_call.1} parent=1 // pred_region
      _
    $region17: #{tpu_custom_call.1} parent=1 // pred_fallthru
      _
    %97 = vsyncpa [#allocation3], 1

</llo_original>
